<compile_context>
chip_gen: v7x
topology: tpu7x:2x2x1
jax: 0.10.0
libtpu: 0.0.40
codegen_flags: <defaults>
</compile_context>

<pallas_src>
import jax
import jax.numpy as jnp
from jax.experimental import pallas as pl
from jax.experimental.pallas import tpu as pltpu


def _set_layer_kernel(x_ref, w_ref, b_ref, o_ref):
    # x_ref: (TB, N, F_in)   w_ref: (2*F_in, F_out)   b_ref: (1, F_out)
    # o_ref: (TB*N, F_out)
    tb, n, f_in = x_ref.shape
    x = x_ref[...].astype(jnp.float32)                       # mean in f32
    xm = jnp.mean(x, axis=1)                                  # (TB, F_in) per-batch set mean
    xm_b = jnp.broadcast_to(xm[:, None, :], (tb, n, f_in))    # broadcast mean to every row
    x_cat = jnp.concatenate([x, xm_b], axis=-1)               # (TB, N, 2*F_in)
    x_cat = x_cat.reshape(tb * n, 2 * f_in)                   # MXU sees M = TB*N
    y = jnp.dot(x_cat, w_ref[...], preferred_element_type=jnp.float32)
    y = y + b_ref[...]                                        # (TB*N, F_out) + (1, F_out)
    o_ref[...] = y.astype(o_ref.dtype)


def general_set_layer(x, gamma_w, gamma_b, lambda_w, *, rows_per_tile=512):
    """x: (B, N, F_in); gamma_w/lambda_w: (F_in, F_out); gamma_b: (F_out,) or (1, F_out)."""
    B, N, F_in = x.shape
    F_out = gamma_w.shape[1]

    # Fuse the two matmuls: [x | mean(x)] @ [Wg ; -Wl] + b  ==  x@Wg + b - mean(x)@Wl
    w_cat = jnp.concatenate([gamma_w, -lambda_w], axis=0)     # (2*F_in, F_out)
    b2 = gamma_b.reshape(1, F_out)

    # Whole-batch tile: TB batches -> TB*N rows per grid step (target ~rows_per_tile).
    tb = max(1, min(B, pl.cdiv(rows_per_tile, N)))
    while B % tb != 0:                 # keep tiles uniform
        tb -= 1
    if (tb * N) % 8 != 0 and tb != B:  # keep the flattened output block sublane-aligned
        tb = B
    grid = (B // tb,)

    # Explicit VMEM budget: double-buffered x/out blocks + weights + bias, with
    # generous headroom for in-kernel f32 temporaries. Capped well under v7x's 64 MiB.
    itemsize = jnp.dtype(x.dtype).itemsize
    w_itemsize = jnp.dtype(w_cat.dtype).itemsize
    block_bytes = (2 * tb * N * (F_in + F_out) * itemsize
                   + 2 * (2 * F_in * F_out + F_out) * w_itemsize)
    vmem_limit = int(min(max(4 * block_bytes, 8 << 20), 48 << 20))

    out_flat = pl.pallas_call(
        _set_layer_kernel,
        out_shape=jax.ShapeDtypeStruct((B * N, F_out), x.dtype),
        grid_spec=pltpu.PrefetchScalarGridSpec(
            num_scalar_prefetch=0,
            grid=grid,
            in_specs=[
                pl.BlockSpec((tb, N, F_in), lambda i: (i, 0, 0)),
                pl.BlockSpec((2 * F_in, F_out), lambda i: (0, 0)),
                pl.BlockSpec((1, F_out), lambda i: (0, 0)),
            ],
            out_specs=pl.BlockSpec((tb * N, F_out), lambda i: (i, 0)),
        ),
        compiler_params=pltpu.CompilerParams(
            dimension_semantics=("parallel",),
            vmem_limit_bytes=vmem_limit),
    )(x, w_cat, b2)
    return out_flat.reshape(B, N, F_out)


def _linear_init(key, out_features, in_features):
    """Deterministic nn.Linear-style init: U(-1/sqrt(fan_in), 1/sqrt(fan_in))."""
    bound = 1.0 / jnp.sqrt(in_features)
    kw, kb = jax.random.split(key)
    w = jax.random.uniform(kw, (out_features, in_features),
                           minval=-bound, maxval=bound, dtype=jnp.float32)
    b = jax.random.uniform(kb, (out_features,),
                           minval=-bound, maxval=bound, dtype=jnp.float32)
    return w, b


if __name__ == "__main__":
    B, N = 2, 8            # batch, set size
    F_in, F_out = 32, 32   # in_features, out_features

    root = jax.random.PRNGKey(0)
    k_x, k_gamma, k_lambda = jax.random.split(root, 3)

    x = jax.random.normal(k_x, (B, N, F_in), dtype=jnp.float32)

    # Gamma: Linear(F_in, F_out, bias=True); Lambda: Linear(F_in, F_out, bias=False)
    gamma_w_t, gamma_b = _linear_init(k_gamma, F_out, F_in)   # (F_out, F_in), (F_out,)
    lambda_w_t, _ = _linear_init(k_lambda, F_out, F_in)       # (F_out, F_in)

    # kernel consumes (F_in, F_out) weights (transpose of torch layout)
    gamma_w = gamma_w_t.T
    lambda_w = lambda_w_t.T

    out = general_set_layer(x, gamma_w, gamma_b, lambda_w)
    out = jax.block_until_ready(out)

    # plain-JAX reference for sanity
    xm = jnp.mean(x, axis=1, keepdims=True) @ lambda_w
    ref = (x @ gamma_w + gamma_b) - xm
    assert out.shape == (B, N, F_out)
    assert jnp.allclose(out, ref, atol=1e-5, rtol=1e-5)

    print("KERNEL_OK")
</pallas_src>

<mosaic_0001>
module attributes {stable_mosaic.version = 11 : i64} {
  func.func @_set_layer_kernel(%arg0: i32, %arg1: memref<2x8x32xf32, #tpu.memory_space<vmem>>, %arg2: memref<64x32xf32, #tpu.memory_space<vmem>>, %arg3: memref<1x32xf32, #tpu.memory_space<vmem>>, %arg4: memref<16x32xf32, #tpu.memory_space<vmem>>) attributes {dimension_semantics = [#tpu.dimension_semantics<parallel>], iteration_bounds = array<i64: 1>, scalar_prefetch = 0 : i64, scratch_operands = 0 : i64, tpu.core_type = #tpu.core_type<tc>, window_params = [{transform_indices = @transform_0, window_bounds = array<i64: 2, 8, 32>}, {pipeline_mode = #tpu.pipeline_mode<synchronous>, transform_indices = @transform_1, window_bounds = array<i64: 64, 32>}, {pipeline_mode = #tpu.pipeline_mode<synchronous>, transform_indices = @transform_2, window_bounds = array<i64: 1, 32>}, {transform_indices = @transform_3, window_bounds = array<i64: 16, 32>}]} {
    %c0 = arith.constant 0 : index
    %c0_0 = arith.constant 0 : index
    %c0_1 = arith.constant 0 : index
    %0 = vector.load %arg1[%c0, %c0_0, %c0_1] : memref<2x8x32xf32, #tpu.memory_space<vmem>>, vector<2x8x32xf32>
    %cst = arith.constant dense<0.000000e+00> : vector<2x32xf32>
    %1 = vector.multi_reduction <add>, %0, %cst [1] : vector<2x8x32xf32> to vector<2x32xf32>
    %cst_2 = arith.constant 8.000000e+00 : f32
    %2 = vector.broadcast %cst_2 : f32 to vector<2x32xf32>
    %3 = arith.divf %1, %2 : vector<2x32xf32>
    %4 = vector.shape_cast %3 : vector<2x32xf32> to vector<2x1x32xf32>
    %5 = vector.shape_cast %4 : vector<2x1x32xf32> to vector<2x1x32xf32>
    %6 = vector.broadcast %5 : vector<2x1x32xf32> to vector<2x8x32xf32>
    %7 = tpu.concatenate %0, %6 in 2 : vector<2x8x32xf32>, vector<2x8x32xf32> -> vector<2x8x64xf32>
    %8 = vector.shape_cast %7 : vector<2x8x64xf32> to vector<16x64xf32>
    %c0_3 = arith.constant 0 : index
    %c0_4 = arith.constant 0 : index
    %9 = vector.load %arg2[%c0_3, %c0_4] : memref<64x32xf32, #tpu.memory_space<vmem>>, vector<64x32xf32>
    %cst_5 = arith.constant dense<0.000000e+00> : vector<16x32xf32>
    %10 = tpu.matmul %8, %9, %cst_5 {dimension_numbers = #tpu.dot_dimension_numbers<[1], [0], [0], [1], [0, 0, 1, 1], [], []>} : vector<16x64xf32>, vector<64x32xf32>, vector<16x32xf32> -> vector<16x32xf32>
    %c0_6 = arith.constant 0 : index
    %c0_7 = arith.constant 0 : index
    %11 = vector.load %arg3[%c0_6, %c0_7] : memref<1x32xf32, #tpu.memory_space<vmem>>, vector<1x32xf32>
    %12 = vector.broadcast %11 : vector<1x32xf32> to vector<16x32xf32>
    %13 = arith.addf %10, %12 : vector<16x32xf32>
    %c0_8 = arith.constant 0 : index
    %c0_9 = arith.constant 0 : index
    %14 = vector.load %arg4[%c0_8, %c0_9] : memref<16x32xf32, #tpu.memory_space<vmem>>, vector<16x32xf32>
    tpu.vector_store %arg4[%c0_8, %c0_9], %13 {strides = array<i32>} : memref<16x32xf32, #tpu.memory_space<vmem>>, vector<16x32xf32>,
    return
  }
  func.func @transform_0(%arg0: i32) -> (i32, i32, i32) {
    %c0_i32 = arith.constant 0 : i32
    %c0_i32_0 = arith.constant 0 : i32
    %c0_i32_1 = arith.constant 0 : i32
    return %arg0, %c0_i32, %c0_i32_0 : i32, i32, i32
  }
  func.func @transform_1(%arg0: i32) -> (i32, i32) {
    %c0_i32 = arith.constant 0 : i32
    %c0_i32_0 = arith.constant 0 : i32
    %c0_i32_1 = arith.constant 0 : i32
    return %c0_i32, %c0_i32_0 : i32, i32
  }
  func.func @transform_2(%arg0: i32) -> (i32, i32) {
    %c0_i32 = arith.constant 0 : i32
    %c0_i32_0 = arith.constant 0 : i32
    %c0_i32_1 = arith.constant 0 : i32
    return %c0_i32, %c0_i32_0 : i32, i32
  }
  func.func @transform_3(%arg0: i32) -> (i32, i32) {
    %c0_i32 = arith.constant 0 : i32
    %c0_i32_0 = arith.constant 0 : i32
    return %arg0, %c0_i32 : i32, i32
  }
}

</mosaic_0001>

<llo_original>
// kernel: tpu_custom_call.1
$region0: #{tpu_custom_call.1}
  #allocation0 [shape = 'u32[]', space=smem, size = 0x4, offset = 0x4, fixed_abs, tag = 'smem constant byte address 0x4 - core index']
  #allocation1 [shape = 'u32[144,128]{1,0:T(1,128)}', space=vmem, size = 0x12000, scoped, tag = 'internal scratch']
  %s0 = inlined_call_operand.vmem [shape: f32[2,8,32], index: 0, kind: input, shape index: {}]
  %s1 = inlined_call_operand.vmem [shape: f32[64,32], index: 1, kind: input, shape index: {}]
  %s2 = inlined_call_operand.vmem [shape: f32[1,32], index: 2, kind: input, shape index: {}]
  %s3 = inlined_call_operand.hbm [shape: f32[16,32], index: 3, kind: output, shape index: {}]
  %s4 = sld [smem:[#allocation0]]
  $region22: #{tpu_custom_call.1} parent=0
    _
  %s6 = ssub.s32 1, %s4
  %s7 = scalar_select 0, %s6, %s4
  $region1: #{tpu_custom_call.1} parent=0
    #allocation2 [shape = 'u8[8192]{0}', space=vmem, size = 0x2000, scoped, tag = 'output window, operand 0, single buffered']
    #allocation3 [shape = 's32[1]{0}', space=sflag, size = 0x4, scoped, tag = 'scoped memory for tpu_custom_call.1']
    %8 = vsyncpa [#allocation3], 0
    // Predicated region
    $region2: #{tpu_custom_call.1} parent=1 // pred_check
      _
    $region3: #{tpu_custom_call.1} parent=1 // pred_check_branch
      %10 = sbr.rel (0) target = $region5
    $region4: #{tpu_custom_call.1} parent=1 // pred_region
      _
    $region5: #{tpu_custom_call.1} parent=1 // pred_fallthru
      _
    // Predicated region
    $region6: #{tpu_custom_call.1} parent=1 // pred_check
      _
    $region7: #{tpu_custom_call.1} parent=1 // pred_check_branch
      %12 = sbr.rel (0) target = $region9
    $region8: #{tpu_custom_call.1} parent=1 // pred_region
      _
    $region9: #{tpu_custom_call.1} parent=1 // pred_fallthru
      _
    // Predicated region
    $region10: #{tpu_custom_call.1} parent=1 // pred_check
      _
    $region11: #{tpu_custom_call.1} parent=1 // pred_check_branch
      %14 = sbr.rel (0) target = $region13
    $region12: #{tpu_custom_call.1} parent=1 // pred_region
      _
    $region13: #{tpu_custom_call.1} parent=1 // pred_fallthru
      _
    %v15 = vld [vmem:[%s0] sm:$0xff]
    %v16 = vld [vmem:[%s0 + $0x8] sm:$0xff]
    %vm17 = vcmask 261120
    %v18 = vsel %vm17, %v15, 0.0
    %v19 = vrot.slane %v18, 4
    %v20 = vadd.f32 %v18, %v19
    %v21 = vrot.slane %v20, 2
    %v22 = vadd.f32 %v20, %v21
    %v23 = vrot.slane %v22, 1
    %v24 = vadd.f32 %v22, %v23
    %v25 = vsel %vm17, %v16, 0.0
    %v26 = vrot.slane %v25, 4
    %v27 = vadd.f32 %v25, %v26
    %v28 = vrot.slane %v27, 2
    %v29 = vadd.f32 %v27, %v28
    %v30 = vrot.slane %v29, 1
    %v31 = vadd.f32 %v29, %v30
    %v32 = vrcp.pop 8.0
    %v33 = vmul.f32 %v24, %v32
    %v34 = vmul.f32 %v31, %v32
    %37 = vrot.lane.b32.xlu0 %v33, 32
    %v38 = vpop.permute.xlu0 %37
    %39 = vrot.lane.b32.xlu0 %v34, 32
    %v40 = vpop.permute.xlu0 %39
    %v43 = vsel %vm17, %v15, %v38
    %v44 = vsel %vm17, %v16, %v40
    %v45 = vld [vmem:[%s1] sm:$0xff]
    %v46 = vld [vmem:[%s1 + $0x8] sm:$0xff]
    %v47 = vld [vmem:[%s1 + $0x10] sm:$0xff]
    %v48 = vld [vmem:[%s1 + $0x18] sm:$0xff]
    %v49 = vld [vmem:[%s1 + $0x20] sm:$0xff]
    %v50 = vld [vmem:[%s1 + $0x28] sm:$0xff]
    %v51 = vld [vmem:[%s1 + $0x30] sm:$0xff]
    %v52 = vld [vmem:[%s1 + $0x38] sm:$0xff]
    %v53 = vld [vmem:[%s2] sm:$0x1]
    %v55 = vlaneseq
    %v56 = vshrl.u32 %v55, 7
    %v57 = vsub.s32 0, %v56
    %v58 = vrot.slane %v53, %v57
    %vm60 = vcmask 523264
    %v62 = vsel %vm60, %v43, 0
    %v65 = vsel %vm60, %v44, 0
    %67 = vmatprep.subr.mxu0 0.0
    %68 = vmatpush1.msra.mxu0 %v45
    %69 = vmatprep.subr.mxu0 0.0
    %70 = vmatpush1.msra.mxu0 %v46
    %71 = vmatprep.subr.mxu0 0.0
    %72 = vmatpush1.msra.mxu0 %v47
    %73 = vmatprep.subr.mxu0 0.0
    %74 = vmatpush1.msra.mxu0 %v48
    %75 = vmatprep.subr.mxu0 0.0
    %76 = vmatpush1.msra.mxu0 %v49
    %77 = vmatprep.subr.mxu0 0.0
    %78 = vmatpush1.msra.mxu0 %v50
    %79 = vmatprep.subr.mxu0 0.0
    %80 = vmatpush1.msra.mxu0 %v51
    %81 = vmatprep.subr.mxu0 0.0
    %82 = vmatpush1.msra.mxu0 %v52
    %83 = vmatprep.subr.mxu0 0.0
    %84 = vmatpush1.msra.mxu0 0.0
    %85 = vmatprep.subr.mxu0 0.0
    %86 = vmatpush1.msra.mxu0 0.0
    %87 = vmatprep.subr.mxu0 0.0
    %88 = vmatpush1.msra.mxu0 0.0
    %89 = vmatprep.subr.mxu0 0.0
    %90 = vmatpush1.msra.mxu0 0.0
    %91 = vmatprep.subr.mxu0 0.0
    %92 = vmatpush1.msra.mxu0 0.0
    %93 = vmatprep.subr.mxu0 0.0
    %94 = vmatpush1.msra.mxu0 0.0
    %95 = vmatprep.subr.mxu0 0.0
    %96 = vmatpush1.msra.mxu0 0.0
    %97 = vmatprep.subr.mxu0 0.0
    %98 = vmatpush1.msra.mxu0 0.0
    %99 = vmatprep.subr.mxu0 0.0
    %100 = vmatpush1.msra.mxu0 0.0
    %101 = vmatprep.subr.mxu0 0.0
    %102 = vmatpush1.msra.mxu0 0.0
    %103 = vmatprep.subr.mxu0 0.0
    %104 = vmatpush1.msra.mxu0 0.0
    %105 = vmatprep.subr.mxu0 0.0
    %106 = vmatpush1.msra.mxu0 0.0
    %107 = vmatprep.subr.mxu0 0.0
    %108 = vmatpush1.msra.mxu0 0.0
    %109 = vmatprep.subr.mxu0 0.0
    %110 = vmatpush1.msra.mxu0 0.0
    %111 = vmatprep.subr.mxu0 0.0
    %112 = vmatpush1.msra.mxu0 0.0
    %113 = vmatprep.subr.mxu0 0.0
    %114 = vmatpush1.msra.mxu0 0.0
    %115 = vmatprep.subr.mxu0 0.0
    %116 = vmatpush1.msra.mxu0 0.0
    %117 = vmatprep.subr.mxu0 0.0
    %118 = vmatpush1.msra.mxu0 0.0
    %119 = vmatprep.subr.mxu0 0.0
    %120 = vmatpush1.msra.mxu0 0.0
    %121 = vmatprep.subr.mxu0 0.0
    %122 = vmatpush1.msra.mxu0 0.0
    %123 = vmatprep.subr.mxu0 0.0
    %124 = vmatpush1.msra.mxu0 0.0
    %125 = vmatprep.subr.mxu0 0.0
    %126 = vmatpush1.msra.mxu0 0.0
    %127 = vmatprep.subr.mxu0 0.0
    %128 = vmatpush1.msra.mxu0 0.0
    %129 = vmatprep.subr.mxu0 0.0
    %130 = vmatpush1.msra.mxu0 0.0
    %131 = vmatprep.mubr.f32.mxu0 0.0
    %132 = vmatmul.mubr.f32.gmra.mrb[0].mxu0 %v62
    %v133 = vpop.f32.mrb[0].mxu0
    %v134 = vadd.f32 %v58, %v133
    %v135 = vpop.f32.mrb[0].mxu0
    %136 = vmatprep.mubr.f32.mxu0 0.0
    %137 = vmatmul.mubr.f32.gmra.mrb[0].mxu0 %v65
    %v138 = vpop.f32.mrb[0].mxu0
    %v139 = vadd.f32 %v58, %v138
    %v140 = vpop.f32.mrb[0].mxu0
    %141 = vdwg.mxu0
    %142 = vst.msk [vmem:[#allocation2] sm:$0xff] %vm17, %v134
    %143 = vst.msk [vmem:[#allocation2 + $0x8] sm:$0xff] %vm17, %v139
    // Predicated region
    $region14: #{tpu_custom_call.1} parent=1 // pred_check
      _
    $region15: #{tpu_custom_call.1} parent=1 // pred_check_branch
      %145 = sbr.rel (0) target = $region17
    $region16: #{tpu_custom_call.1} parent=1 // pred_region
      %s147 = ssub.s32 256, 256
      %148 = vsyncadd [#allocation3], %s147
      %s149 = sshll.u32 [#allocation2], 4
      %s150 = int_to_ptr.vmem [resolvable:$true] %s149
      %155 = dma.vmem_to_hbm [thread:$0]  %s150, 256, %s3, [#allocation3], 128, 128, 8
    $region17: #{tpu_custom_call.1} parent=1 // pred_fallthru
      _
    // Predicated region
    $region18: #{tpu_custom_call.1} parent=1 // pred_check
      _
    $region19: #{tpu_custom_call.1} parent=1 // pred_check_branch
      %157 = sbr.rel (0) target = $region21
    $region20: #{tpu_custom_call.1} parent=1 // pred_region
      %158 = dma.done [#allocation3], 256
    $region21: #{tpu_custom_call.1} parent=1 // pred_fallthru
      _
    %159 = vsyncpa [#allocation3], 1

</llo_original>
